<compile_context>
chip_gen: v7x
topology: tpu7x:2x2x1
jax: 0.10.0
libtpu: 0.0.40
codegen_flags: <defaults>
</compile_context>

<pallas_src>
import functools

import jax
import jax.numpy as jnp
import numpy as np
from jax import lax
from jax.experimental import pallas as pl
from jax.experimental.pallas import tpu as pltpu


def _temporal_block_kernel(xh_ref, w1_ref, b1_ref, w2_ref, b2_ref, wd_ref, bd_ref,
                           o_ref, *, K, dilation, padding, Lt, L):
    """One (batch, length-tile) element per grid step.

    xh_ref : (Cin, Lt + 2*padding)  bf16  x window for this tile (incl. right halo),
                                          globally right-zero-padded
    w1_ref : (Cout, K*Cin)          bf16  conv1 weight, tap-major flattened
    w2_ref : (Cout, K*Cout)         bf16  conv2 weight, tap-major flattened
    wd_ref : (Cout, Cin)            bf16  1x1 downsample weight
    b*_ref : (Cout, 1)              f32
    o_ref  : (Cout, Lt)             f32
    """
    t = pl.program_id(1)
    Lh = Lt + padding  # conv1 output width needed: tile + right halo for conv2

    # ----- conv1: im2col (K dilated shifts stacked on sublanes) + ONE MXU matmul -----
    x_stack = jnp.concatenate(
        [xh_ref[:, k * dilation:k * dilation + Lh] for k in range(K)], axis=0)
    h = jnp.dot(w1_ref[...], x_stack, preferred_element_type=jnp.float32)
    h = jnp.maximum(h + b1_ref[...], 0.0)          # chomp + ReLU (dropout = id)

    # conv2's input is h right-padded with ZEROS beyond global column L (the model
    # pads h itself, not the conv1-of-zero-padded-x extension), so mask the columns
    # whose global index >= L (covers both the halo tail and any tile padding).
    col = lax.broadcasted_iota(jnp.int32, h.shape, 1) + t * Lt
    h = jnp.where(col < L, h, 0.0).astype(jnp.bfloat16)

    # ----- conv2: im2col + ONE MXU matmul -----
    h_stack = jnp.concatenate(
        [h[:, k * dilation:k * dilation + Lt] for k in range(K)], axis=0)
    out = jnp.dot(w2_ref[...], h_stack, preferred_element_type=jnp.float32)
    out = jnp.maximum(out + b2_ref[...], 0.0)      # chomp + ReLU (dropout = id)

    # ----- residual (1x1 downsample conv) from the lane-aligned head of the window -----
    res = jnp.dot(wd_ref[...], xh_ref[:, :Lt],
                  preferred_element_type=jnp.float32) + bd_ref[...]

    o_ref[...] = jnp.maximum(out + res, 0.0).astype(o_ref.dtype)


def temporal_block(x, w1, b1, w2, b2, wd, bd, *,
                   kernel_size, dilation, padding, l_tile=512):
    """x: (N, Cin, L) f32; conv weights in PyTorch layout (Cout, Cin, K) -> (N, Cout, L) f32."""
    assert l_tile % 128 == 0
    N, Cin, L = x.shape
    Cout = w1.shape[0]
    K = kernel_size

    # ---- length tiling (lane-aligned tiles; single full-length tile when L is small) ----
    if L <= l_tile:
        Lt, T = L, 1
    else:
        Lt = l_tile
        T = pl.cdiv(L, Lt)
    L_out = T * Lt
    Lw = Lt + 2 * padding  # per-tile x window: tile + look-ahead halo for conv1∘conv2

    # Right zero pad (Chomp1d drops the LEFT `padding` samples => effective right pad),
    # cast to bf16 so DMA moves half the bytes, and materialize per-tile windows with
    # their halos so each grid step is self-contained (overlap-by-recompute, no carries).
    x_full = jnp.pad(x, ((0, 0), (0, 0), (0, L_out + 2 * padding - L))).astype(jnp.bfloat16)
    xh = jnp.stack([x_full[:, :, t * Lt:t * Lt + Lw] for t in range(T)], axis=1)  # (N,T,Cin,Lw)

    # 2-D lane-dense weights, tap-major so they match the stacked (K*C, L) im2col inputs.
    w1_2d = jnp.transpose(w1, (0, 2, 1)).reshape(Cout, K * Cin).astype(jnp.bfloat16)
    w2_2d = jnp.transpose(w2, (0, 2, 1)).reshape(Cout, K * Cout).astype(jnp.bfloat16)
    wd_2d = wd.reshape(Cout, Cin).astype(jnp.bfloat16)
    b1c = b1.reshape(Cout, 1).astype(jnp.float32)
    b2c = b2.reshape(Cout, 1).astype(jnp.float32)
    bdc = bd.reshape(Cout, 1).astype(jnp.float32)

    kernel = functools.partial(_temporal_block_kernel, K=K, dilation=dilation,
                               padding=padding, Lt=Lt, L=L)

    out = pl.pallas_call(
        kernel,
        out_shape=jax.ShapeDtypeStruct((N, Cout, L_out), jnp.float32),
        grid_spec=pltpu.PrefetchScalarGridSpec(
            num_scalar_prefetch=0,
            grid=(N, T),
            in_specs=[
                # per-(batch, tile) x window, lane-dense, data at offset 0
                pl.BlockSpec((None, None, Cin, Lw), lambda n, t: (n, t, 0, 0)),
                # weights / biases: constant index_maps -> fetched once, not per step
                pl.BlockSpec((Cout, K * Cin), lambda n, t: (0, 0)),
                pl.BlockSpec((Cout, 1), lambda n, t: (0, 0)),
                pl.BlockSpec((Cout, K * Cout), lambda n, t: (0, 0)),
                pl.BlockSpec((Cout, 1), lambda n, t: (0, 0)),
                pl.BlockSpec((Cout, Cin), lambda n, t: (0, 0)),
                pl.BlockSpec((Cout, 1), lambda n, t: (0, 0)),
            ],
            out_specs=pl.BlockSpec((None, Cout, Lt), lambda n, t: (n, 0, t)),
        ),
        compiler_params=pltpu.CompilerParams(
            # both axes independent -> shard across v7x's 2 TensorCores even at small N
            dimension_semantics=("parallel", "parallel"),
            # explicit budget (v7x: 64 MiB physical; v5e/v6e: 128 MiB, 16/32 MiB default scoped)
            vmem_limit_bytes=64 * 1024 * 1024,
        ),
    )(xh, w1_2d, b1c, w2_2d, b2c, wd_2d, bdc)

    return out[:, :, :L]


def _reference(x, w1, b1, w2, b2, wd, bd, *, dilation, padding):
    """Pure-JAX reference mirroring the PyTorch module exactly (NCL / OIW).

    Note: Chomp1d in this module is x[:, :, padding:] (drops the FIRST `padding`
    samples), so the chomp here slices the LEFT side of the padded conv output.
    """
    dn = ("NCH", "OIH", "NCH")

    def conv(inp, w, b, dil, pad):
        y = lax.conv_general_dilated(
            inp, w, window_strides=(1,), padding=[(pad, pad)],
            rhs_dilation=(dil,), dimension_numbers=dn)
        if pad > 0:
            y = y[:, :, pad:]                      # Chomp1d: drop first `pad` samples
        return y + b[None, :, None]

    h = jax.nn.relu(conv(x, w1, b1, dilation, padding))
    out = jax.nn.relu(conv(h, w2, b2, dilation, padding))
    res = conv(x, wd, bd, 1, 0)
    return jax.nn.relu(out + res)


if __name__ == "__main__":
    key = jax.random.PRNGKey(0)

    def run_case(k, *, N, Cin, Cout, L, K, dilation, l_tile):
        padding = (K - 1) * dilation
        ks = jax.random.split(k, 7)
        x = jax.random.normal(ks[0], (N, Cin, L), dtype=jnp.float32)
        # conv weights ~ N(0, 0.01) as in init_weights(); small random biases
        w1 = 0.01 * jax.random.normal(ks[1], (Cout, Cin, K), dtype=jnp.float32)
        w2 = 0.01 * jax.random.normal(ks[2], (Cout, Cout, K), dtype=jnp.float32)
        wd = 0.01 * jax.random.normal(ks[3], (Cout, Cin, 1), dtype=jnp.float32)
        b1 = 0.1 * jax.random.normal(ks[4], (Cout,), dtype=jnp.float32)
        b2 = 0.1 * jax.random.normal(ks[5], (Cout,), dtype=jnp.float32)
        bd = 0.1 * jax.random.normal(ks[6], (Cout,), dtype=jnp.float32)

        y = temporal_block(x, w1, b1, w2, b2, wd, bd,
                           kernel_size=K, dilation=dilation, padding=padding,
                           l_tile=l_tile)
        y = jax.block_until_ready(y)

        # Reference in f32 on the same bf16-rounded inputs (kernel feeds the MXU bf16
        # with f32 accumulation); tolerance absorbs the in-kernel bf16 cast of h.
        q = lambda a: a.astype(jnp.bfloat16).astype(jnp.float32)
        y_ref = _reference(q(x), q(w1), b1, q(w2), b2, q(wd), bd,
                           dilation=dilation, padding=padding)
        np.testing.assert_allclose(np.asarray(y), np.asarray(y_ref),
                                   rtol=2e-2, atol=2e-3)

    k1, k2 = jax.random.split(key)
    # Small config matching the module (n_inputs != n_outputs so downsample exists);
    # single full-length tile.
    run_case(k1, N=2, Cin=4, Cout=8, L=16, K=3, dilation=2, l_tile=512)
    # Exercises the L-tiling path: 3 lane-aligned tiles of 128, L not a tile multiple,
    # larger dilation/halo.
    run_case(k2, N=2, Cin=4, Cout=8, L=300, K=3, dilation=4, l_tile=128)

    print("KERNEL_OK")
</pallas_src>

<mosaic_0001>
module attributes {stable_mosaic.version = 11 : i64} {
  func.func @_temporal_block_kernel(%arg0: i32, %arg1: i32, %arg2: memref<1x1x4x24xbf16, #tpu.memory_space<vmem>>, %arg3: memref<8x12xbf16, #tpu.memory_space<vmem>>, %arg4: memref<8x1xf32, #tpu.memory_space<vmem>>, %arg5: memref<8x24xbf16, #tpu.memory_space<vmem>>, %arg6: memref<8x1xf32, #tpu.memory_space<vmem>>, %arg7: memref<8x4xbf16, #tpu.memory_space<vmem>>, %arg8: memref<8x1xf32, #tpu.memory_space<vmem>>, %arg9: memref<1x8x16xf32, #tpu.memory_space<vmem>>) attributes {dimension_semantics = [#tpu.dimension_semantics<parallel>, #tpu.dimension_semantics<parallel>], iteration_bounds = array<i64: 2, 1>, scalar_prefetch = 0 : i64, scratch_operands = 0 : i64, tpu.core_type = #tpu.core_type<tc>, window_params = [{transform_indices = @transform_0, window_bounds = array<i64: 1, 1, 4, 24>}, {pipeline_mode = #tpu.pipeline_mode<synchronous>, transform_indices = @transform_1, window_bounds = array<i64: 8, 12>}, {pipeline_mode = #tpu.pipeline_mode<synchronous>, transform_indices = @transform_2, window_bounds = array<i64: 8, 1>}, {pipeline_mode = #tpu.pipeline_mode<synchronous>, transform_indices = @transform_3, window_bounds = array<i64: 8, 24>}, {pipeline_mode = #tpu.pipeline_mode<synchronous>, transform_indices = @transform_4, window_bounds = array<i64: 8, 1>}, {pipeline_mode = #tpu.pipeline_mode<synchronous>, transform_indices = @transform_5, window_bounds = array<i64: 8, 4>}, {pipeline_mode = #tpu.pipeline_mode<synchronous>, transform_indices = @transform_6, window_bounds = array<i64: 8, 1>}, {transform_indices = @transform_7, window_bounds = array<i64: 1, 8, 16>}]} {
    %c0 = arith.constant 0 : index
    %c0_0 = arith.constant 0 : index
    %c0_1 = arith.constant 0 : index
    %c0_2 = arith.constant 0 : index
    %0 = vector.load %arg2[%c0, %c0_0, %c0_1, %c0_2] : memref<1x1x4x24xbf16, #tpu.memory_space<vmem>>, vector<1x1x4x20xbf16>
    %1 = vector.shape_cast %0 : vector<1x1x4x20xbf16> to vector<4x20xbf16>
    %c0_3 = arith.constant 0 : index
    %c0_4 = arith.constant 0 : index
    %c0_5 = arith.constant 0 : index
    %c2 = arith.constant 2 : index
    %2 = vector.load %arg2[%c0_3, %c0_4, %c0_5, %c2] : memref<1x1x4x24xbf16, #tpu.memory_space<vmem>>, vector<1x1x4x20xbf16>
    %3 = vector.shape_cast %2 : vector<1x1x4x20xbf16> to vector<4x20xbf16>
    %c0_6 = arith.constant 0 : index
    %c0_7 = arith.constant 0 : index
    %c0_8 = arith.constant 0 : index
    %c4 = arith.constant 4 : index
    %4 = vector.load %arg2[%c0_6, %c0_7, %c0_8, %c4] : memref<1x1x4x24xbf16, #tpu.memory_space<vmem>>, vector<1x1x4x20xbf16>
    %5 = vector.shape_cast %4 : vector<1x1x4x20xbf16> to vector<4x20xbf16>
    %6 = tpu.concatenate %1, %3, %5 in 0 : vector<4x20xbf16>, vector<4x20xbf16>, vector<4x20xbf16> -> vector<12x20xbf16>
    %c0_9 = arith.constant 0 : index
    %c0_10 = arith.constant 0 : index
    %7 = vector.load %arg3[%c0_9, %c0_10] : memref<8x12xbf16, #tpu.memory_space<vmem>>, vector<8x12xbf16>
    %cst = arith.constant dense<0.000000e+00> : vector<8x20xf32>
    %8 = tpu.matmul %7, %6, %cst {dimension_numbers = #tpu.dot_dimension_numbers<[1], [0], [0], [1], [0, 0, 1, 1], [], []>} : vector<8x12xbf16>, vector<12x20xbf16>, vector<8x20xf32> -> vector<8x20xf32>
    %c0_11 = arith.constant 0 : index
    %c0_12 = arith.constant 0 : index
    %9 = vector.load %arg4[%c0_11, %c0_12] : memref<8x1xf32, #tpu.memory_space<vmem>>, vector<8x1xf32>
    %10 = vector.broadcast %9 : vector<8x1xf32> to vector<8x20xf32>
    %11 = arith.addf %8, %10 : vector<8x20xf32>
    %cst_13 = arith.constant 0.000000e+00 : f32
    %12 = vector.broadcast %cst_13 : f32 to vector<8x20xf32>
    %13 = arith.maximumf %11, %12 : vector<8x20xf32>
    %14 = tpu.iota {dimensions = array<i32: 1>} : vector<8x20xi32>
    %c16_i32 = arith.constant 16 : i32
    %15 = arith.muli %arg1, %c16_i32 : i32
    %16 = vector.broadcast %15 : i32 to vector<8x20xi32>
    %17 = arith.addi %14, %16 : vector<8x20xi32>
    %c16_i32_14 = arith.constant 16 : i32
    %18 = vector.broadcast %c16_i32_14 : i32 to vector<8x20xi32>
    %19 = arith.cmpi slt, %17, %18 : vector<8x20xi32>
    %cst_15 = arith.constant 0.000000e+00 : f32
    %20 = vector.broadcast %cst_15 : f32 to vector<8x20xf32>
    %21 = arith.select %19, %13, %20 : vector<8x20xi1>, vector<8x20xf32>
    %22 = arith.truncf %21 : vector<8x20xf32> to vector<8x20xbf16>
    %23 = vector.extract_strided_slice %22 {offsets = [0, 0], sizes = [8, 16], strides = [1, 1]} : vector<8x20xbf16> to vector<8x16xbf16>
    %24 = vector.extract_strided_slice %22 {offsets = [0, 2], sizes = [8, 16], strides = [1, 1]} : vector<8x20xbf16> to vector<8x16xbf16>
    %25 = vector.extract_strided_slice %22 {offsets = [0, 4], sizes = [8, 16], strides = [1, 1]} : vector<8x20xbf16> to vector<8x16xbf16>
    %26 = tpu.concatenate %23, %24, %25 in 0 : vector<8x16xbf16>, vector<8x16xbf16>, vector<8x16xbf16> -> vector<24x16xbf16>
    %c0_16 = arith.constant 0 : index
    %c0_17 = arith.constant 0 : index
    %27 = vector.load %arg5[%c0_16, %c0_17] : memref<8x24xbf16, #tpu.memory_space<vmem>>, vector<8x24xbf16>
    %cst_18 = arith.constant dense<0.000000e+00> : vector<8x16xf32>
    %28 = tpu.matmul %27, %26, %cst_18 {dimension_numbers = #tpu.dot_dimension_numbers<[1], [0], [0], [1], [0, 0, 1, 1], [], []>} : vector<8x24xbf16>, vector<24x16xbf16>, vector<8x16xf32> -> vector<8x16xf32>
    %c0_19 = arith.constant 0 : index
    %c0_20 = arith.constant 0 : index
    %29 = vector.load %arg6[%c0_19, %c0_20] : memref<8x1xf32, #tpu.memory_space<vmem>>, vector<8x1xf32>
    %30 = vector.broadcast %29 : vector<8x1xf32> to vector<8x16xf32>
    %31 = arith.addf %28, %30 : vector<8x16xf32>
    %cst_21 = arith.constant 0.000000e+00 : f32
    %32 = vector.broadcast %cst_21 : f32 to vector<8x16xf32>
    %33 = arith.maximumf %31, %32 : vector<8x16xf32>
    %c0_22 = arith.constant 0 : index
    %c0_23 = arith.constant 0 : index
    %34 = vector.load %arg7[%c0_22, %c0_23] : memref<8x4xbf16, #tpu.memory_space<vmem>>, vector<8x4xbf16>
    %c0_24 = arith.constant 0 : index
    %c0_25 = arith.constant 0 : index
    %c0_26 = arith.constant 0 : index
    %c0_27 = arith.constant 0 : index
    %35 = vector.load %arg2[%c0_24, %c0_25, %c0_26, %c0_27] : memref<1x1x4x24xbf16, #tpu.memory_space<vmem>>, vector<1x1x4x16xbf16>
    %36 = vector.shape_cast %35 : vector<1x1x4x16xbf16> to vector<4x16xbf16>
    %cst_28 = arith.constant dense<0.000000e+00> : vector<8x16xf32>
    %37 = tpu.matmul %34, %36, %cst_28 {dimension_numbers = #tpu.dot_dimension_numbers<[1], [0], [0], [1], [0, 0, 1, 1], [], []>} : vector<8x4xbf16>, vector<4x16xbf16>, vector<8x16xf32> -> vector<8x16xf32>
    %c0_29 = arith.constant 0 : index
    %c0_30 = arith.constant 0 : index
    %38 = vector.load %arg8[%c0_29, %c0_30] : memref<8x1xf32, #tpu.memory_space<vmem>>, vector<8x1xf32>
    %39 = vector.broadcast %38 : vector<8x1xf32> to vector<8x16xf32>
    %40 = arith.addf %37, %39 : vector<8x16xf32>
    %41 = arith.addf %33, %40 : vector<8x16xf32>
    %cst_31 = arith.constant 0.000000e+00 : f32
    %42 = vector.broadcast %cst_31 : f32 to vector<8x16xf32>
    %43 = arith.maximumf %41, %42 : vector<8x16xf32>
    %c0_32 = arith.constant 0 : index
    %c0_33 = arith.constant 0 : index
    %c0_34 = arith.constant 0 : index
    %44 = vector.load %arg9[%c0_32, %c0_33, %c0_34] : memref<1x8x16xf32, #tpu.memory_space<vmem>>, vector<1x8x16xf32>
    %45 = vector.shape_cast %44 : vector<1x8x16xf32> to vector<8x16xf32>
    %46 = vector.shape_cast %43 : vector<8x16xf32> to vector<1x8x16xf32>
    tpu.vector_store %arg9[%c0_32, %c0_33, %c0_34], %46 {strides = array<i32>} : memref<1x8x16xf32, #tpu.memory_space<vmem>>, vector<1x8x16xf32>,
    return
  }
  func.func @transform_0(%arg0: i32, %arg1: i32) -> (i32, i32, i32, i32) {
    %c0_i32 = arith.constant 0 : i32
    %c0_i32_0 = arith.constant 0 : i32
    %c0_i32_1 = arith.constant 0 : i32
    return %arg0, %arg1, %c0_i32, %c0_i32_0 : i32, i32, i32, i32
  }
  func.func @transform_1(%arg0: i32, %arg1: i32) -> (i32, i32) {
    %c0_i32 = arith.constant 0 : i32
    %c0_i32_0 = arith.constant 0 : i32
    %c0_i32_1 = arith.constant 0 : i32
    return %c0_i32, %c0_i32_0 : i32, i32
  }
  func.func @transform_2(%arg0: i32, %arg1: i32) -> (i32, i32) {
    %c0_i32 = arith.constant 0 : i32
    %c0_i32_0 = arith.constant 0 : i32
    %c0_i32_1 = arith.constant 0 : i32
    return %c0_i32, %c0_i32_0 : i32, i32
  }
  func.func @transform_3(%arg0: i32, %arg1: i32) -> (i32, i32) {
    %c0_i32 = arith.constant 0 : i32
    %c0_i32_0 = arith.constant 0 : i32
    %c0_i32_1 = arith.constant 0 : i32
    return %c0_i32, %c0_i32_0 : i32, i32
  }
  func.func @transform_4(%arg0: i32, %arg1: i32) -> (i32, i32) {
    %c0_i32 = arith.constant 0 : i32
    %c0_i32_0 = arith.constant 0 : i32
    %c0_i32_1 = arith.constant 0 : i32
    return %c0_i32, %c0_i32_0 : i32, i32
  }
  func.func @transform_5(%arg0: i32, %arg1: i32) -> (i32, i32) {
    %c0_i32 = arith.constant 0 : i32
    %c0_i32_0 = arith.constant 0 : i32
    %c0_i32_1 = arith.constant 0 : i32
    return %c0_i32, %c0_i32_0 : i32, i32
  }
  func.func @transform_6(%arg0: i32, %arg1: i32) -> (i32, i32) {
    %c0_i32 = arith.constant 0 : i32
    %c0_i32_0 = arith.constant 0 : i32
    %c0_i32_1 = arith.constant 0 : i32
    return %c0_i32, %c0_i32_0 : i32, i32
  }
  func.func @transform_7(%arg0: i32, %arg1: i32) -> (i32, i32, i32) {
    %c0_i32 = arith.constant 0 : i32
    %c0_i32_0 = arith.constant 0 : i32
    return %arg0, %c0_i32, %arg1 : i32, i32, i32
  }
}

</mosaic_0001>

<llo_original>
// kernel: tpu_custom_call.1
$region0: #{tpu_custom_call.1}
  #allocation0 [shape = 'u32[]', space=smem, size = 0x4, offset = 0x4, fixed_abs, tag = 'smem constant byte address 0x4 - core index']
  #allocation1 [shape = 'u32[144,128]{1,0:T(1,128)}', space=vmem, size = 0x12000, scoped, tag = 'internal scratch']
  %s0 = inlined_call_operand.hbm [shape: bf16[2,1,4,24], index: 0, kind: input, shape index: {}]
  %s1 = inlined_call_operand.hbm [shape: bf16[8,12], index: 1, kind: input, shape index: {}]
  %s2 = inlined_call_operand.hbm [shape: f32[8,1], index: 2, kind: input, shape index: {}]
  %s3 = inlined_call_operand.hbm [shape: bf16[8,24], index: 3, kind: input, shape index: {}]
  %s4 = inlined_call_operand.hbm [shape: f32[8,1], index: 4, kind: input, shape index: {}]
  %s5 = inlined_call_operand.hbm [shape: bf16[8,4], index: 5, kind: input, shape index: {}]
  %s6 = inlined_call_operand.hbm [shape: f32[8,1], index: 6, kind: input, shape index: {}]
  %s7 = inlined_call_operand.hbm [shape: f32[2,8,16], index: 7, kind: output, shape index: {}]
  %s8 = sld [smem:[#allocation0]]
  $region89: #{tpu_custom_call.1} parent=0
    _
  %s10 = ssub.s32 1, %s8
  %s11 = scalar_select 0, %s10, %s8
  $region1: #{tpu_custom_call.1} parent=0
    #allocation2 [shape = 'u8[2048]{0}', space=vmem, size = 0x800, scoped, tag = 'input window, operand 0']
    #allocation3 [shape = 's32[2]{0}', space=sflag, size = 0x8, scoped, tag = 'scoped memory for tpu_custom_call.1']
    #allocation4 [shape = 's32[2]{0}', space=sflag, size = 0x8, scoped, tag = 'scoped memory for tpu_custom_call.1']
    #allocation5 [shape = 'u8[2048]{0}', space=vmem, size = 0x800, scoped, tag = 'input window, operand 1, single buffered']
    #allocation6 [shape = 's32[1]{0}', space=sflag, size = 0x4, scoped, tag = 'scoped memory for tpu_custom_call.1']
    #allocation7 [shape = 'u8[4096]{0}', space=vmem, size = 0x1000, scoped, tag = 'input window, operand 2, single buffered']
    #allocation8 [shape = 'u8[2048]{0}', space=vmem, size = 0x800, scoped, tag = 'input window, operand 3, single buffered']
    #allocation9 [shape = 's32[1]{0}', space=sflag, size = 0x4, scoped, tag = 'scoped memory for tpu_custom_call.1']
    #allocation10 [shape = 'u8[4096]{0}', space=vmem, size = 0x1000, scoped, tag = 'input window, operand 4, single buffered']
    #allocation11 [shape = 'u8[2048]{0}', space=vmem, size = 0x800, scoped, tag = 'input window, operand 5, single buffered']
    #allocation12 [shape = 's32[1]{0}', space=sflag, size = 0x4, scoped, tag = 'scoped memory for tpu_custom_call.1']
    #allocation13 [shape = 'u8[4096]{0}', space=vmem, size = 0x1000, scoped, tag = 'input window, operand 6, single buffered']
    #allocation14 [shape = 'u8[8192]{0}', space=vmem, size = 0x2000, scoped, tag = 'output window, operand 0']
    %12 = vsyncpa [#allocation3], 0
    %s13 = scalar_lea.sflag [#allocation3], 1
    %14 = vsyncpa %s13, 0
    %15 = vsyncpa [#allocation6], 0
    %16 = vsyncpa [#allocation9], 0
    %17 = vsyncpa [#allocation12], 0
    %18 = vsyncpa [#allocation4], 0
    %s19 = scalar_lea.sflag [#allocation4], 1
    %20 = vsyncpa %s19, 0
    loop: start=0, step=1, limit=4
    $region2: #{tpu_custom_call.1} parent=1 // loop_pre_header
      _
    $region3: #{tpu_custom_call.1} parent=1 // loop_header
      %s22 = sphi 0, %s26
      %p23 = scmp.ge.s32.totalorder %s22, 4
      %s29 = sphi 0, %s41
      %s30 = sphi 0, %s37
      %s31 = sphi 0, %s29
      %s32 = sphi 0, %s30
      %s33 = sphi 0, %s31
      %s34 = sphi 0, %s32
      %s46 = sphi 0, %s48
      %s49 = sphi 0, %s46
      %s50 = sphi 0, %s49
      %s66 = sphi 0, %s50
      %s70 = sphi 0, %s70
      %s72 = sphi 0, %s70
      %s73 = sphi 0, %s72
      %s87 = sphi 0, %s73
      %s91 = sphi 0, %s91
      %s93 = sphi 0, %s91
      %s94 = sphi 0, %s93
      %s108 = sphi 0, %s94
      %s112 = sphi 0, %s112
      %s114 = sphi 0, %s112
      %s115 = sphi 0, %s114
      %s129 = sphi 0, %s115
      %s133 = sphi 0, %s133
      %s135 = sphi 0, %s133
      %s136 = sphi 0, %s135
      %s150 = sphi 0, %s136
      %s154 = sphi 0, %s154
      %s156 = sphi 0, %s154
      %s157 = sphi 0, %s156
      %s171 = sphi 0, %s157
      %s175 = sphi 0, %s175
      %s177 = sphi 0, %s175
      %s178 = sphi 0, %s177
      %s192 = sphi 0, %s178
      %s200 = sphi 0, %s202
      %s203 = sphi 0, %s200
      %s204 = sphi 0, %s203
      %s220 = sphi 0, %s204
    $region4: #{tpu_custom_call.1} parent=1 // loop_header_branch
      %25 = sbr.rel (%p23) target = $region8
    $region5: #{tpu_custom_call.1} parent=1 // loop_body
      %s27 = ssub.s32 %s22, 1
      %s28 = ssub.s32 %s22, 2
      %s35 = sadd.s32 1, %s30
      %p36 = scmp.ge.s32.totalorder %s35, 1
      %s37 = scalar_select %p36, 0, %s35
      %s38 = sadd.s32 1, %s29
      %s39 = scalar_select %p36, %s38, %s29
      %p40 = scmp.ge.s32.totalorder %s39, 2
      %s41 = scalar_select %p40, 0, %s39
      %s42 = ssub.s32 %s29, %s41
      %s43 = ssub.s32 %s30, %s37
      %s44 = sor.u32 %s42, %s43
      %p45 = scmp.eq.s32.totalorder %s44, 0
      %s47 = sadd.s32 %s46, 1
      %s48 = scalar_select %p45, %s46, %s47
      %p51 = pneg %p45
      %p52 = scmp.eq.s32.totalorder %s22, 1
      %p53 = por %p51, %p52
      %p54 = scmp.ne.s32.totalorder %s46, %s49
      %p55 = scmp.eq.s32.totalorder %s22, 0
      %p56 = por %p54, %p55
      %p57 = scmp.ne.s32.totalorder %s46, %s49
      %p58 = scmp.eq.s32.totalorder %s27, 1
      %p59 = por %p57, %p58
      %p60 = scmp.ne.s32.totalorder %s49, %s50
      %p61 = scmp.eq.s32.totalorder %s27, 0
      %p62 = por %p60, %p61
      %p63 = scmp.ne.s32.totalorder %s49, %s50
      %p64 = scmp.eq.s32.totalorder %s28, 1
      %p65 = por %p63, %p64
      %p67 = scmp.ne.s32.totalorder %s50, %s66
      %p68 = scmp.eq.s32.totalorder %s28, 0
      %p69 = por %p67, %p68
      %s71 = sadd.s32 %s70, 1
      %p74 = scmp.eq.s32.totalorder %s22, 1
      %p75 = scmp.ne.s32.totalorder %s70, %s72
      %p76 = scmp.eq.s32.totalorder %s22, 0
      %p77 = por %p75, %p76
      %p78 = scmp.ne.s32.totalorder %s70, %s72
      %p79 = scmp.eq.s32.totalorder %s27, 1
      %p80 = por %p78, %p79
      %p81 = scmp.ne.s32.totalorder %s72, %s73
      %p82 = scmp.eq.s32.totalorder %s27, 0
      %p83 = por %p81, %p82
      %p84 = scmp.ne.s32.totalorder %s72, %s73
      %p85 = scmp.eq.s32.totalorder %s28, 1
      %p86 = por %p84, %p85
      %p88 = scmp.ne.s32.totalorder %s73, %s87
      %p89 = scmp.eq.s32.totalorder %s28, 0
      %p90 = por %p88, %p89
      %s92 = sadd.s32 %s91, 1
      %p95 = scmp.eq.s32.totalorder %s22, 1
      %p96 = scmp.ne.s32.totalorder %s91, %s93
      %p97 = scmp.eq.s32.totalorder %s22, 0
      %p98 = por %p96, %p97
      %p99 = scmp.ne.s32.totalorder %s91, %s93
      %p100 = scmp.eq.s32.totalorder %s27, 1
      %p101 = por %p99, %p100
      %p102 = scmp.ne.s32.totalorder %s93, %s94
      %p103 = scmp.eq.s32.totalorder %s27, 0
      %p104 = por %p102, %p103
      %p105 = scmp.ne.s32.totalorder %s93, %s94
      %p106 = scmp.eq.s32.totalorder %s28, 1
      %p107 = por %p105, %p106
      %p109 = scmp.ne.s32.totalorder %s94, %s108
      %p110 = scmp.eq.s32.totalorder %s28, 0
      %p111 = por %p109, %p110
      %s113 = sadd.s32 %s112, 1
      %p116 = scmp.eq.s32.totalorder %s22, 1
      %p117 = scmp.ne.s32.totalorder %s112, %s114
      %p118 = scmp.eq.s32.totalorder %s22, 0
      %p119 = por %p117, %p118
      %p120 = scmp.ne.s32.totalorder %s112, %s114
      %p121 = scmp.eq.s32.totalorder %s27, 1
      %p122 = por %p120, %p121
      %p123 = scmp.ne.s32.totalorder %s114, %s115
      %p124 = scmp.eq.s32.totalorder %s27, 0
      %p125 = por %p123, %p124
      %p126 = scmp.ne.s32.totalorder %s114, %s115
      %p127 = scmp.eq.s32.totalorder %s28, 1
      %p128 = por %p126, %p127
      %p130 = scmp.ne.s32.totalorder %s115, %s129
      %p131 = scmp.eq.s32.totalorder %s28, 0
      %p132 = por %p130, %p131
      %s134 = sadd.s32 %s133, 1
      %p137 = scmp.eq.s32.totalorder %s22, 1
      %p138 = scmp.ne.s32.totalorder %s133, %s135
      %p139 = scmp.eq.s32.totalorder %s22, 0
      %p140 = por %p138, %p139
      %p141 = scmp.ne.s32.totalorder %s133, %s135
      %p142 = scmp.eq.s32.totalorder %s27, 1
      %p143 = por %p141, %p142
      %p144 = scmp.ne.s32.totalorder %s135, %s136
      %p145 = scmp.eq.s32.totalorder %s27, 0
      %p146 = por %p144, %p145
      %p147 = scmp.ne.s32.totalorder %s135, %s136
      %p148 = scmp.eq.s32.totalorder %s28, 1
      %p149 = por %p147, %p148
      %p151 = scmp.ne.s32.totalorder %s136, %s150
      %p152 = scmp.eq.s32.totalorder %s28, 0
      %p153 = por %p151, %p152
      %s155 = sadd.s32 %s154, 1
      %p158 = scmp.eq.s32.totalorder %s22, 1
      %p159 = scmp.ne.s32.totalorder %s154, %s156
      %p160 = scmp.eq.s32.totalorder %s22, 0
      %p161 = por %p159, %p160
      %p162 = scmp.ne.s32.totalorder %s154, %s156
      %p163 = scmp.eq.s32.totalorder %s27, 1
      %p164 = por %p162, %p163
      %p165 = scmp.ne.s32.totalorder %s156, %s157
      %p166 = scmp.eq.s32.totalorder %s27, 0
      %p167 = por %p165, %p166
      %p168 = scmp.ne.s32.totalorder %s156, %s157
      %p169 = scmp.eq.s32.totalorder %s28, 1
      %p170 = por %p168, %p169
      %p172 = scmp.ne.s32.totalorder %s157, %s171
      %p173 = scmp.eq.s32.totalorder %s28, 0
      %p174 = por %p172, %p173
      %s176 = sadd.s32 %s175, 1
      %p179 = scmp.eq.s32.totalorder %s22, 1
      %p180 = scmp.ne.s32.totalorder %s175, %s177
      %p181 = scmp.eq.s32.totalorder %s22, 0
      %p182 = por %p180, %p181
      %p183 = scmp.ne.s32.totalorder %s175, %s177
      %p184 = scmp.eq.s32.totalorder %s27, 1
      %p185 = por %p183, %p184
      %p186 = scmp.ne.s32.totalorder %s177, %s178
      %p187 = scmp.eq.s32.totalorder %s27, 0
      %p188 = por %p186, %p187
      %p189 = scmp.ne.s32.totalorder %s177, %s178
      %p190 = scmp.eq.s32.totalorder %s28, 1
      %p191 = por %p189, %p190
      %p193 = scmp.ne.s32.totalorder %s178, %s192
      %p194 = scmp.eq.s32.totalorder %s28, 0
      %p195 = por %p193, %p194
      %s196 = ssub.s32 %s29, %s41
      %s197 = ssub.s32 %s30, %s37
      %s198 = sor.u32 %s196, %s197
      %p199 = scmp.eq.s32.totalorder %s198, 0
      %s201 = sadd.s32 %s200, 1
      %s202 = scalar_select %p199, %s200, %s201
      %p205 = pneg %p199
      %p206 = scmp.eq.s32.totalorder %s22, 1
      %p207 = por %p205, %p206
      %p208 = scmp.ne.s32.totalorder %s200, %s203
      %p209 = scmp.eq.s32.totalorder %s22, 0
      %p210 = por %p208, %p209
      %p211 = scmp.ne.s32.totalorder %s200, %s203
      %p212 = scmp.eq.s32.totalorder %s27, 1
      %p213 = por %p211, %p212
      %p214 = scmp.ne.s32.totalorder %s203, %s204
      %p215 = scmp.eq.s32.totalorder %s27, 0
      %p216 = por %p214, %p215
      %p217 = scmp.ne.s32.totalorder %s203, %s204
      %p218 = scmp.eq.s32.totalorder %s28, 1
      %p219 = por %p217, %p218
      %p221 = scmp.ne.s32.totalorder %s204, %s220
      %p222 = scmp.eq.s32.totalorder %s28, 0
      %p223 = por %p221, %p222
      %p224 = scmp.le.s32.totalorder 1, %s22
      %p225 = scmp.lt.s32.totalorder %s22, 3
      %p226 = pnand %p224, %p225
      %p227 = pneg %p226
      // Predicated region
      $region9: #{tpu_custom_call.1} parent=5 // pred_check
        _
      $region10: #{tpu_custom_call.1} parent=5 // pred_check_branch
        %229 = sbr.rel (%p226) target = $region12
      $region11: #{tpu_custom_call.1} parent=5 // pred_region
        %s230 = ssub.s32 %s22, 1
        // Predicated region
        $region13: #{tpu_custom_call.1} parent=11 // pred_check
          %p231 = pneg %p83
        $region14: #{tpu_custom_call.1} parent=11 // pred_check_branch
          %233 = sbr.rel (%p231) target = $region16
        $region15: #{tpu_custom_call.1} parent=11 // pred_region
          %s235 = ssub.s32 64, 64
          %236 = vsyncadd [#allocation6], %s235
          %s238 = sshll.u32 [#allocation5], 4
          %s239 = int_to_ptr.vmem [resolvable:$true] %s238
          %241 = dma.hbm_to_vmem [thread:$0]  %s1, 64, %s239, [#allocation6]
        $region16: #{tpu_custom_call.1} parent=11 // pred_fallthru
          _
        // Predicated region
        $region17: #{tpu_custom_call.1} parent=11 // pred_check
          %p242 = pneg %p104
        $region18: #{tpu_custom_call.1} parent=11 // pred_check_branch
          %244 = sbr.rel (%p242) target = $region20
        $region19: #{tpu_custom_call.1} parent=11 // pred_region
          %s246 = ssub.s32 128, 128
          %247 = vsyncadd [#allocation6], %s246
          %s249 = sshll.u32 [#allocation7], 4
          %s250 = int_to_ptr.vmem [resolvable:$true] %s249
          %252 = dma.hbm_to_vmem [thread:$0]  %s2, 128, %s250, [#allocation6]
        $region20: #{tpu_custom_call.1} parent=11 // pred_fallthru
          _
        // Predicated region
        $region21: #{tpu_custom_call.1} parent=11 // pred_check
          %p253 = pneg %p125
        $region22: #{tpu_custom_call.1} parent=11 // pred_check_branch
          %255 = sbr.rel (%p253) target = $region24
        $region23: #{tpu_custom_call.1} parent=11 // pred_region
          %s257 = ssub.s32 64, 64
          %258 = vsyncadd [#allocation9], %s257
          %s260 = sshll.u32 [#allocation8], 4
          %s261 = int_to_ptr.vmem [resolvable:$true] %s260
          %263 = dma.hbm_to_vmem [thread:$0]  %s3, 64, %s261, [#allocation9]
        $region24: #{tpu_custom_call.1} parent=11 // pred_fallthru
          _
        // Predicated region
        $region25: #{tpu_custom_call.1} parent=11 // pred_check
          %p264 = pneg %p146
        $region26: #{tpu_custom_call.1} parent=11 // pred_check_branch
          %266 = sbr.rel (%p264) target = $region28
        $region27: #{tpu_custom_call.1} parent=11 // pred_region
          %s268 = ssub.s32 128, 128
          %269 = vsyncadd [#allocation9], %s268
          %s271 = sshll.u32 [#allocation10], 4
          %s272 = int_to_ptr.vmem [resolvable:$true] %s271
          %274 = dma.hbm_to_vmem [thread:$0]  %s4, 128, %s272, [#allocation9]
        $region28: #{tpu_custom_call.1} parent=11 // pred_fallthru
          _
        // Predicated region
        $region29: #{tpu_custom_call.1} parent=11 // pred_check
          %p275 = pneg %p167
        $region30: #{tpu_custom_call.1} parent=11 // pred_check_branch
          %277 = sbr.rel (%p275) target = $region32
        $region31: #{tpu_custom_call.1} parent=11 // pred_region
          %s279 = ssub.s32 64, 64
          %280 = vsyncadd [#allocation12], %s279
          %s282 = sshll.u32 [#allocation11], 4
          %s283 = int_to_ptr.vmem [resolvable:$true] %s282
          %285 = dma.hbm_to_vmem [thread:$0]  %s5, 64, %s283, [#allocation12]
        $region32: #{tpu_custom_call.1} parent=11 // pred_fallthru
          _
        // Predicated region
        $region33: #{tpu_custom_call.1} parent=11 // pred_check
          %p286 = pneg %p188
        $region34: #{tpu_custom_call.1} parent=11 // pred_check_branch
          %288 = sbr.rel (%p286) target = $region36
        $region35: #{tpu_custom_call.1} parent=11 // pred_region
          %s290 = ssub.s32 128, 128
          %291 = vsyncadd [#allocation12], %s290
          %s293 = sshll.u32 [#allocation13], 4
          %s294 = int_to_ptr.vmem [resolvable:$true] %s293
          %296 = dma.hbm_to_vmem [thread:$0]  %s6, 128, %s294, [#allocation12]
        $region36: #{tpu_custom_call.1} parent=11 // pred_fallthru
          _
      $region12: #{tpu_custom_call.1} parent=5 // pred_fallthru
        _
      %p297 = scmp.lt.s32.totalorder %s22, 2
      // Predicated region
      $region37: #{tpu_custom_call.1} parent=5 // pred_check
        %p298 = pneg %p297
      $region38: #{tpu_custom_call.1} parent=5 // pred_check_branch
        %300 = sbr.rel (%p298) target = $region40
      $region39: #{tpu_custom_call.1} parent=5 // pred_region
        // Predicated region
        $region41: #{tpu_custom_call.1} parent=39 // pred_check
          %p301 = pneg %p56
        $region42: #{tpu_custom_call.1} parent=39 // pred_check_branch
          %303 = sbr.rel (%p301) target = $region44
        $region43: #{tpu_custom_call.1} parent=39 // pred_region
          %s304 = sand.u32 %s46, 1
          %s305 = scalar_lea.sflag [#allocation3], %s304
          %s306 = sand.u32 %s46, 1
          %s307 = smul.addr %s306, 2
          %s308 = scalar_lea.vmem [#allocation2], %s307
          %s310 = ssub.s32 32, 32
          %311 = vsyncadd %s305, %s310
          %s312 = sadd.s32 %s30, %s29
          %s313 = smul.addr %s312, 32
          %s314 = scalar_lea.hbm %s0, %s313
          %s316 = sshll.u32 %s308, 4
          %s317 = int_to_ptr.vmem [resolvable:$true] %s316
          %319 = dma.hbm_to_vmem [thread:$0]  %s314, 32, %s317, %s305
        $region44: #{tpu_custom_call.1} parent=39 // pred_fallthru
          _
      $region40: #{tpu_custom_call.1} parent=5 // pred_fallthru
        _
      %p320 = scmp.le.s32.totalorder 1, %s22
      %p321 = scmp.lt.s32.totalorder %s22, 3
      %p322 = pnand %p320, %p321
      %p323 = pneg %p322
      // Predicated region
      $region45: #{tpu_custom_call.1} parent=5 // pred_check
        _
      $region46: #{tpu_custom_call.1} parent=5 // pred_check_branch
        %325 = sbr.rel (%p322) target = $region48
      $region47: #{tpu_custom_call.1} parent=5 // pred_region
        %s326 = ssub.s32 %s22, 1
        %s327 = sand.u32 %s49, 1
        %s328 = scalar_lea.sflag [#allocation3], %s327
        %s329 = sand.u32 %s49, 1
        %s330 = smul.addr %s329, 2
        %s331 = scalar_lea.vmem [#allocation2], %s330
        // Predicated region
        $region49: #{tpu_custom_call.1} parent=47 // pred_check
          %p332 = pneg %p62
        $region50: #{tpu_custom_call.1} parent=47 // pred_check_branch
          %334 = sbr.rel (%p332) target = $region52
        $region51: #{tpu_custom_call.1} parent=47 // pred_region
          %335 = dma.done %s328, 32
        $region52: #{tpu_custom_call.1} parent=47 // pred_fallthru
          _
        // Predicated region
        $region53: #{tpu_custom_call.1} parent=47 // pred_check
          %p336 = pneg %p83
        $region54: #{tpu_custom_call.1} parent=47 // pred_check_branch
          %338 = sbr.rel (%p336) target = $region56
        $region55: #{tpu_custom_call.1} parent=47 // pred_region
          %339 = dma.done [#allocation6], 64
        $region56: #{tpu_custom_call.1} parent=47 // pred_fallthru
          _
        // Predicated region
        $region57: #{tpu_custom_call.1} parent=47 // pred_check
          %p340 = pneg %p104
        $region58: #{tpu_custom_call.1} parent=47 // pred_check_branch
          %342 = sbr.rel (%p340) target = $region60
        $region59: #{tpu_custom_call.1} parent=47 // pred_region
          %343 = dma.done [#allocation6], 128
        $region60: #{tpu_custom_call.1} parent=47 // pred_fallthru
          _
        // Predicated region
        $region61: #{tpu_custom_call.1} parent=47 // pred_check
          %p344 = pneg %p125
        $region62: #{tpu_custom_call.1} parent=47 // pred_check_branch
          %346 = sbr.rel (%p344) target = $region64
        $region63: #{tpu_custom_call.1} parent=47 // pred_region
          %347 = dma.done [#allocation9], 64
        $region64: #{tpu_custom_call.1} parent=47 // pred_fallthru
          _
        // Predicated region
        $region65: #{tpu_custom_call.1} parent=47 // pred_check
          %p348 = pneg %p146
        $region66: #{tpu_custom_call.1} parent=47 // pred_check_branch
          %350 = sbr.rel (%p348) target = $region68
        $region67: #{tpu_custom_call.1} parent=47 // pred_region
          %351 = dma.done [#allocation9], 128
        $region68: #{tpu_custom_call.1} parent=47 // pred_fallthru
          _
        // Predicated region
        $region69: #{tpu_custom_call.1} parent=47 // pred_check
          %p352 = pneg %p167
        $region70: #{tpu_custom_call.1} parent=47 // pred_check_branch
          %354 = sbr.rel (%p352) target = $region72
        $region71: #{tpu_custom_call.1} parent=47 // pred_region
          %355 = dma.done [#allocation12], 64
        $region72: #{tpu_custom_call.1} parent=47 // pred_fallthru
          _
        // Predicated region
        $region73: #{tpu_custom_call.1} parent=47 // pred_check
          %p356 = pneg %p188
        $region74: #{tpu_custom_call.1} parent=47 // pred_check_branch
          %358 = sbr.rel (%p356) target = $region76
        $region75: #{tpu_custom_call.1} parent=47 // pred_region
          %359 = dma.done [#allocation12], 128
        $region76: #{tpu_custom_call.1} parent=47 // pred_fallthru
          _
        %s360 = sand.u32 %s49, 1
        %s361 = scalar_lea.sflag [#allocation3], %s360
        %s362 = sand.u32 %s49, 1
        %s363 = smul.addr %s362, 2
        %s364 = scalar_lea.vmem [#allocation2], %s363
        %p365 = pneg %p62
        %p366 = pneg %p59
        %p367 = pneg %p83
        %p368 = pneg %p80
        %p369 = pneg %p104
        %p370 = pneg %p101
        %p371 = pneg %p125
        %p372 = pneg %p122
        %p373 = pneg %p146
        %p374 = pneg %p143
        %p375 = pneg %p167
        %p376 = pneg %p164
        %p377 = pneg %p188
        %p378 = pneg %p185
        %p379 = pneg %p216
        %p380 = pneg %p213
        %s381 = sand.u32 %s203, 1
        %s382 = scalar_lea.sflag [#allocation4], %s381
        %s383 = sand.u32 %s203, 1
        %s384 = smul.addr %s383, 8
        %s385 = scalar_lea.vmem [#allocation14], %s384
        %v387 = vld [vmem:[%s331] sm:$0x3]
        %v389 = vcombine.low %v387, %v387
        %v391 = vunpack.c.l.s4 1983009808
        %v392 = vunpack.c.0.s8 %v391
        %v393 = vlaneseq
        %v394 = vshrl.u32 %v393, 7
        %v395 = vsub.s32 %v392, %v394
        %v396 = vrot.slane %v389, %v395
        %v398 = vunpack.c.l.s4 1983009808
        %v399 = vunpack.c.0.s8 %v398
        %v400 = vlaneseq
        %v401 = vshrl.u32 %v400, 7
        %v402 = vsub.s32 %v399, %v401
        %v403 = vrot.slane %v387, %v402
        %404 = vrot.lane.b32.xlu0 %v396, 126
        %v405 = vpop.permute.xlu0 %404
        %v406 = vcombine.low %v403, %v403
        %407 = vrot.lane.b32.xlu0 %v406, 124
        %v408 = vpop.permute.xlu0 %407
        %vm409 = vcmask 1041408
        %v412 = vsel %vm409, %v387, %v405
        %vm413 = vcmask 1043456
        %v415 = vsel %vm413, %v412, %v408
        %v416 = vld [vmem:[#allocation5] sm:$0xf]
        %v417 = vld [vmem:[#allocation7] sm:$0xff]
        %419 = vset.pattern.permute.xlu0 0
        %420 = vperm.xlu0 %419, %v417
        %v421 = vpop.permute.xlu0 %420
        %vm423 = vcmask 97280
        %v425 = vsel %vm423, %v416, 0
        %vm427 = vcmask 1045504
        %v428 = vsel %vm427, %v415, 0
        %430 = vmatprep.subr.bf16.mxu0 0
        %431 = vmatpush1.bf16.msra.mxu0 %v428
        %432 = vmatprep.subr.bf16.mxu0 0
        %433 = vmatpush1.bf16.msra.mxu0 0
        %434 = vmatprep.subr.bf16.mxu0 0
        %435 = vmatpush1.bf16.msra.mxu0 0
        %436 = vmatprep.subr.bf16.mxu0 0
        %437 = vmatpush1.bf16.msra.mxu0 0
        %438 = vmatprep.subr.bf16.mxu0 0
        %439 = vmatpush1.bf16.msra.mxu0 0
        %440 = vmatprep.subr.bf16.mxu0 0
        %441 = vmatpush1.bf16.msra.mxu0 0
        %442 = vmatprep.subr.bf16.mxu0 0
        %443 = vmatpush1.bf16.msra.mxu0 0
        %444 = vmatprep.subr.bf16.mxu0 0
        %445 = vmatpush1.bf16.msra.mxu0 0
        %446 = vmatprep.subr.bf16.mxu0 0
        %447 = vmatpush1.bf16.msra.mxu0 0
        %448 = vmatprep.subr.bf16.mxu0 0
        %449 = vmatpush1.bf16.msra.mxu0 0
        %450 = vmatprep.subr.bf16.mxu0 0
        %451 = vmatpush1.bf16.msra.mxu0 0
        %452 = vmatprep.subr.bf16.mxu0 0
        %453 = vmatpush1.bf16.msra.mxu0 0
        %454 = vmatprep.subr.bf16.mxu0 0
        %455 = vmatpush1.bf16.msra.mxu0 0
        %456 = vmatprep.subr.bf16.mxu0 0
        %457 = vmatpush1.bf16.msra.mxu0 0
        %458 = vmatprep.subr.bf16.mxu0 0
        %459 = vmatpush1.bf16.msra.mxu0 0
        %460 = vmatprep.subr.bf16.mxu0 0
        %461 = vmatpush1.bf16.msra.mxu0 0
        %462 = vmatprep.mubr.bf16.mxu0 0
        %463 = vmatmul.mubr.bf16.gmra.mrb[0].mxu0 %v425
        %v464 = vpop.f32.mrb[0].mxu0
        %v465 = vadd.f32 %v421, %v464
        %v466 = vpop.f32.mrb[0].mxu0
        %v467 = vpop.f32.mrb[0].mxu0
        %v468 = vpop.f32.mrb[0].mxu0
        %469 = vdwg.mxu0
        %v470 = vmax.f32 %v465, 0.0
        %v471 = vlaneseq
        %v472 = vand.u32 %v471, 127
        %s473 = smul.u32 %s32, 16
        %v474 = vstv %s473
        %v475 = vadd.s32 %v472, %v474
        %vm476 = vcmp.lt.s32.totalorder %v475, 16
        %v477 = vsel %vm476, %v470, 0.0
        %v478 = vpack.c.bf16 %v477, %v477
        %v480 = vrot.slane %v478, 4
        %481 = vrot.lane.b32.xlu0 %v480, 126
        %v482 = vpop.permute.xlu0 %481
        %483 = vrot.lane.b32.xlu0 %v478, 124
        %v484 = vpop.permute.xlu0 %483
        %v487 = vsel %vm413, %v478, %v482
        %v489 = vld [vmem:[#allocation8] sm:$0xf]
        %v490 = vld [vmem:[#allocation10] sm:$0xff]
        %492 = vset.pattern.permute.xlu0 0
        %493 = vperm.xlu0 %492, %v490
        %v494 = vpop.permute.xlu0 %493
        %vm496 = vcmask 195584
        %v498 = vsel %vm496, %v489, 0
        %v501 = vsel %vm413, %v484, 0
        %503 = vmatprep.subr.bf16.mxu0 0
        %504 = vmatpush1.bf16.msra.mxu0 %v487
        %505 = vmatprep.subr.bf16.mxu0 0
        %506 = vmatpush1.bf16.msra.mxu0 %v501
        %507 = vmatprep.subr.bf16.mxu0 0
        %508 = vmatpush1.bf16.msra.mxu0 0
        %509 = vmatprep.subr.bf16.mxu0 0
        %510 = vmatpush1.bf16.msra.mxu0 0
        %511 = vmatprep.subr.bf16.mxu0 0
        %512 = vmatpush1.bf16.msra.mxu0 0
        %513 = vmatprep.subr.bf16.mxu0 0
        %514 = vmatpush1.bf16.msra.mxu0 0
        %515 = vmatprep.subr.bf16.mxu0 0
        %516 = vmatpush1.bf16.msra.mxu0 0
        %517 = vmatprep.subr.bf16.mxu0 0
        %518 = vmatpush1.bf16.msra.mxu0 0
        %519 = vmatprep.subr.bf16.mxu0 0
        %520 = vmatpush1.bf16.msra.mxu0 0
        %521 = vmatprep.subr.bf16.mxu0 0
        %522 = vmatpush1.bf16.msra.mxu0 0
        %523 = vmatprep.subr.bf16.mxu0 0
        %524 = vmatpush1.bf16.msra.mxu0 0
        %525 = vmatprep.subr.bf16.mxu0 0
        %526 = vmatpush1.bf16.msra.mxu0 0
        %527 = vmatprep.subr.bf16.mxu0 0
        %528 = vmatpush1.bf16.msra.mxu0 0
        %529 = vmatprep.subr.bf16.mxu0 0
        %530 = vmatpush1.bf16.msra.mxu0 0
        %531 = vmatprep.subr.bf16.mxu0 0
        %532 = vmatpush1.bf16.msra.mxu0 0
        %533 = vmatprep.subr.bf16.mxu0 0
        %534 = vmatpush1.bf16.msra.mxu0 0
        %535 = vmatprep.mubr.bf16.mxu0 0
        %536 = vmatmul.mubr.bf16.gmra.mrb[0].mxu0 %v498
        %v537 = vpop.f32.mrb[0].mxu0
        %v538 = vadd.f32 %v494, %v537
        %v539 = vpop.f32.mrb[0].mxu0
        %v540 = vpop.f32.mrb[0].mxu0
        %v541 = vpop.f32.mrb[0].mxu0
        %542 = vdwg.mxu0
        %v543 = vmax.f32 %v538, 0.0
        %v544 = vld [vmem:[#allocation11] sm:$0xf]
        %v545 = vld [vmem:[%s331] sm:$0x3]
        %v546 = vld [vmem:[#allocation13] sm:$0xff]
        %548 = vset.pattern.permute.xlu0 0
        %549 = vperm.xlu0 %548, %v546
        %v550 = vpop.permute.xlu0 %549
        %vm552 = vcmask 31744
        %v554 = vsel %vm552, %v544, 0
        %v557 = vsel %vm409, %v545, 0
        %559 = vmatprep.subr.bf16.mxu0 0
        %560 = vmatpush1.bf16.msra.mxu0 %v557
        %561 = vmatprep.subr.bf16.mxu0 0
        %562 = vmatpush1.bf16.msra.mxu0 0
        %563 = vmatprep.subr.bf16.mxu0 0
        %564 = vmatpush1.bf16.msra.mxu0 0
        %565 = vmatprep.subr.bf16.mxu0 0
        %566 = vmatpush1.bf16.msra.mxu0 0
        %567 = vmatprep.subr.bf16.mxu0 0
        %568 = vmatpush1.bf16.msra.mxu0 0
        %569 = vmatprep.subr.bf16.mxu0 0
        %570 = vmatpush1.bf16.msra.mxu0 0
        %571 = vmatprep.subr.bf16.mxu0 0
        %572 = vmatpush1.bf16.msra.mxu0 0
        %573 = vmatprep.subr.bf16.mxu0 0
        %574 = vmatpush1.bf16.msra.mxu0 0
        %575 = vmatprep.subr.bf16.mxu0 0
        %576 = vmatpush1.bf16.msra.mxu0 0
        %577 = vmatprep.subr.bf16.mxu0 0
        %578 = vmatpush1.bf16.msra.mxu0 0
        %579 = vmatprep.subr.bf16.mxu0 0
        %580 = vmatpush1.bf16.msra.mxu0 0
        %581 = vmatprep.subr.bf16.mxu0 0
        %582 = vmatpush1.bf16.msra.mxu0 0
        %583 = vmatprep.subr.bf16.mxu0 0
        %584 = vmatpush1.bf16.msra.mxu0 0
        %585 = vmatprep.subr.bf16.mxu0 0
        %586 = vmatpush1.bf16.msra.mxu0 0
        %587 = vmatprep.subr.bf16.mxu0 0
        %588 = vmatpush1.bf16.msra.mxu0 0
        %589 = vmatprep.subr.bf16.mxu0 0
        %590 = vmatpush1.bf16.msra.mxu0 0
        %591 = vmatprep.mubr.bf16.mxu0 0
        %592 = vmatmul.mubr.bf16.gmra.mrb[0].mxu0 %v554
        %v593 = vpop.f32.mrb[0].mxu0
        %v594 = vadd.f32 %v550, %v593
        %v595 = vpop.f32.mrb[0].mxu0
        %v596 = vpop.f32.mrb[0].mxu0
        %v597 = vpop.f32.mrb[0].mxu0
        %598 = vdwg.mxu0
        %v599 = vadd.f32 %v543, %v594
        %v600 = vmax.f32 %v599, 0.0
        %vm601 = vcmask 130048
        %602 = vst.msk [vmem:[%s385] sm:$0xff] %vm601, %v600
        %s603 = sand.u32 %s203, 1
        %s604 = scalar_lea.sflag [#allocation4], %s603
        %s605 = sand.u32 %s203, 1
        %s606 = smul.addr %s605, 8
        %s607 = scalar_lea.vmem [#allocation14], %s606
        // Predicated region
        $region77: #{tpu_custom_call.1} parent=47 // pred_check
          %p608 = pneg %p213
        $region78: #{tpu_custom_call.1} parent=47 // pred_check_branch
          %610 = sbr.rel (%p608) target = $region80
        $region79: #{tpu_custom_call.1} parent=47 // pred_region
          %s612 = ssub.s32 128, 128
          %613 = vsyncadd %s604, %s612
          %s614 = sadd.s32 %s32, %s31
          %s615 = smul.addr %s614, 128
          %s616 = scalar_lea.hbm %s7, %s615
          %s618 = sshll.u32 %s607, 4
          %s619 = int_to_ptr.vmem [resolvable:$true] %s618
          %621 = dma.vmem_to_hbm [thread:$0]  %s619, 128, %s616, %s604
        $region80: #{tpu_custom_call.1} parent=47 // pred_fallthru
          _
      $region48: #{tpu_custom_call.1} parent=5 // pred_fallthru
        _
      %p622 = scmp.le.s32.totalorder 2, %s22
      // Predicated region
      $region81: #{tpu_custom_call.1} parent=5 // pred_check
        %p623 = pneg %p622
      $region82: #{tpu_custom_call.1} parent=5 // pred_check_branch
        %625 = sbr.rel (%p623) target = $region84
      $region83: #{tpu_custom_call.1} parent=5 // pred_region
        %s626 = ssub.s32 %s22, 2
        // Predicated region
        $region85: #{tpu_custom_call.1} parent=83 // pred_check
          %p627 = pneg %p219
        $region86: #{tpu_custom_call.1} parent=83 // pred_check_branch
          %629 = sbr.rel (%p627) target = $region88
        $region87: #{tpu_custom_call.1} parent=83 // pred_region
          %s630 = sand.u32 %s204, 1
          %s631 = scalar_lea.sflag [#allocation4], %s630
          %s632 = sand.u32 %s204, 1
          %s633 = smul.addr %s632, 8
          %s634 = scalar_lea.vmem [#allocation14], %s633
          %635 = dma.done %s631, 128
        $region88: #{tpu_custom_call.1} parent=83 // pred_fallthru
          _
      $region84: #{tpu_custom_call.1} parent=5 // pred_fallthru
        _
    $region6: #{tpu_custom_call.1} parent=1 // loop_footer
      %s26 = sadd.s32 1, %s22
    $region7: #{tpu_custom_call.1} parent=1 // loop_footer_branch
      %21 = sbr.rel target = $region3
    $region8: #{tpu_custom_call.1} parent=1 // loop_exit
      _
    %636 = vsyncpa [#allocation3], 1
    %s637 = scalar_lea.sflag [#allocation3], 1
    %638 = vsyncpa %s637, 1
    %639 = vsyncpa [#allocation6], 1
    %640 = vsyncpa [#allocation9], 1
    %641 = vsyncpa [#allocation12], 1
    %642 = vsyncpa [#allocation4], 1
    %s643 = scalar_lea.sflag [#allocation4], 1
    %644 = vsyncpa %s643, 1

</llo_original>
